<compile_context>
chip_gen: v6e
topology: v6e:2x2x1
jax: 0.10.0
libtpu: 0.0.40
codegen_flags: <defaults>
</compile_context>

<pallas_src>
import jax
import jax.numpy as jnp
from jax.experimental import pallas as pl
from jax.experimental.pallas import tpu as pltpu


def _round_up(x, m):
    return ((x + m - 1) // m) * m


def _vmem_budget():
    """Return (tile-selection budget, vmem_limit_bytes), sized per chip."""
    cap = 64 << 20  # conservative default: v7x per-TensorCore physical VMEM
    try:
        info = pltpu.get_tpu_info()
        cap = int(getattr(info, "vmem_capacity_bytes", cap)) or cap
    except Exception:
        pass
    limit = min(cap * 3 // 4, 96 << 20)   # v7x -> ~48 MiB, v5e/v6e -> ~96 MiB
    budget = limit * 4 // 5               # headroom for compiler scratch/sems
    return budget, limit


# ----------------------------------------------------------------------------
# Pass 1: h = tanh(x @ w1 + b1)   (computed once for all rows, bf16 output)
# ----------------------------------------------------------------------------
def _layer1_kernel(x_ref, w1_ref, b1_ref, h_ref, acc_ref):
    # x_ref : (tm, tk)  bf16 activation tile
    # w1_ref: (tk, PH)  bf16 first Linear weight K-slab
    # b1_ref: (1, PH)   f32 bias (grid-constant)
    # h_ref : (tm, PH)  bf16 output tile (written on the last K step)
    # acc_ref: (tm, PH) f32 VMEM accumulator
    k = pl.program_id(1)

    @pl.when(k == 0)
    def _():
        acc_ref[...] = jnp.zeros_like(acc_ref)

    acc_ref[...] += jnp.dot(x_ref[...], w1_ref[...],
                            preferred_element_type=jnp.float32)

    @pl.when(k == pl.num_programs(1) - 1)
    def _():
        h_ref[...] = jnp.tanh(acc_ref[...] + b1_ref[...]).astype(h_ref.dtype)


# ----------------------------------------------------------------------------
# Pass 2: y = h @ w2 + b2   (w2 streamed from HBM exactly once)
# ----------------------------------------------------------------------------
def _layer2_kernel(h_ref, w2_ref, b2_ref, o_ref):
    # h_ref : (tm, PH)  bf16 hidden tile
    # w2_ref: (PH, tn)  bf16 second Linear weight slab (outer-axis indexed)
    # b2_ref: (1, tn)   f32 bias slab
    # o_ref : (tm, tn)  output tile
    y = jnp.dot(h_ref[...], w2_ref[...], preferred_element_type=jnp.float32)
    o_ref[...] = (y + b2_ref[...]).astype(o_ref.dtype)


def prefix_mlp(x, w1, b1, w2, b2, *, out_dtype=jnp.float32):
    """x: (M, H) -> (M, OUT) via Linear(H->PH) -> Tanh -> Linear(PH->OUT).

    w1/w2 are expected pre-cast to the compute dtype (bf16); b1/b2 in f32.
    """
    M, H = x.shape
    PH = w1.shape[1]
    OUT = w2.shape[1]
    compute_dtype = w1.dtype
    cs = jnp.dtype(compute_dtype).itemsize
    os_ = jnp.dtype(out_dtype).itemsize

    budget, vmem_limit = _vmem_budget()

    x = x.astype(compute_dtype)          # cheap activation cast (M x H)

    # --------------------------- pass 1 tiling -------------------------------
    tm1 = min(256, _round_up(M, 8))

    def _p1_fits(tk_):
        return (2 * tm1 * tk_ * cs       # x tiles (double-buffered)
                + 2 * tk_ * PH * cs      # w1 K-slab  (Buffered(1) would halve
                + 2 * PH * 4             # b1          these two; micro-opt)
                + 2 * tm1 * PH * cs      # h output tile
                + tm1 * PH * 4) <= budget  # f32 accumulator scratch

    tk = H
    if not _p1_fits(H):
        for cand in (2048, 1024, 512, 256, 128):
            if H % cand == 0 and _p1_fits(cand):
                tk = cand
                break
        # TODO(synk): H both huge and not divisible by an aligned K tile would
        # need a masked K tail; unreachable for real PrefixEncoder configs.
    nk = pl.cdiv(H, tk)

    h = pl.pallas_call(
        _layer1_kernel,
        out_shape=jax.ShapeDtypeStruct((M, PH), compute_dtype),
        grid_spec=pltpu.PrefetchScalarGridSpec(
            num_scalar_prefetch=0,
            grid=(pl.cdiv(M, tm1), nk),
            in_specs=[
                pl.BlockSpec((tm1, tk), lambda i, k: (i, k)),   # activations
                pl.BlockSpec((tk, PH), lambda i, k: (k, 0)),    # w1 K-slab
                pl.BlockSpec((1, PH), lambda i, k: (0, 0)),     # b1 constant
            ],
            out_specs=pl.BlockSpec((tm1, PH), lambda i, k: (i, 0)),
            scratch_shapes=[pltpu.VMEM((tm1, PH), jnp.float32)],
        ),
        compiler_params=pltpu.CompilerParams(
            dimension_semantics=("parallel", "arbitrary"),
            vmem_limit_bytes=vmem_limit,
        ),
        cost_estimate=pl.CostEstimate(
            flops=2 * M * H * PH,
            transcendentals=M * PH,
            bytes_accessed=M * H * cs + H * PH * cs + PH * 4 + M * PH * cs,
        ),
    )(x, w1, b1)

    # --------------------------- pass 2 tiling -------------------------------
    tm2 = min(256, _round_up(M, 8))

    def _p2_fits(tn_):
        return (2 * tm2 * PH * cs        # h tiles
                + 2 * PH * tn_ * cs      # streamed w2 slab
                + 2 * tn_ * 4            # b2 slab
                + 2 * tm2 * tn_ * os_) <= budget  # output tile

    if OUT % 128 == 0:
        tn = 128
        for cand in (4096, 2048, 1024, 512, 256, 128):
            if OUT % cand == 0 and _p2_fits(cand):
                tn = cand
                break
    else:
        # TODO(synk): OUT not lane-aligned (never happens for real configs,
        # OUT = 2*layers*hidden); fall back to a single full-width tile.
        tn = OUT
    n_out_tiles = max(OUT // tn, 1)

    y = pl.pallas_call(
        _layer2_kernel,
        out_shape=jax.ShapeDtypeStruct((M, OUT), out_dtype),
        grid_spec=pltpu.PrefetchScalarGridSpec(
            num_scalar_prefetch=0,
            # OUT tiles on the OUTER axis: each (PH, tn) slab of w2 is DMA'd
            # from HBM exactly once and reused across every row tile.
            grid=(n_out_tiles, pl.cdiv(M, tm2)),
            in_specs=[
                pl.BlockSpec((tm2, PH), lambda j, i: (i, 0)),   # h (small)
                pl.BlockSpec((PH, tn), lambda j, i: (0, j)),    # w2 slab
                pl.BlockSpec((1, tn), lambda j, i: (0, j)),     # b2 slab
            ],
            out_specs=pl.BlockSpec((tm2, tn), lambda j, i: (i, j)),
        ),
        compiler_params=pltpu.CompilerParams(
            dimension_semantics=("parallel", "parallel"),
            vmem_limit_bytes=vmem_limit,
        ),
        cost_estimate=pl.CostEstimate(
            flops=2 * M * PH * OUT,
            transcendentals=0,
            bytes_accessed=(n_out_tiles * M * PH * cs + PH * OUT * cs
                            + OUT * 4 + M * OUT * os_),
        ),
    )(h, w2, b2)

    return y


# ----------------------------------------------------------------------------
# PrefixEncoder wrapper (mirrors the PyTorch module's forward).
# ----------------------------------------------------------------------------
class PrefixEncoderParams:
    """Deterministic synthetic parameters mirroring PrefixEncoder.__init__.

    MXU operands are pre-cast to bf16 ONCE here so the forward hot path never
    re-materializes bf16 copies of the weights in HBM.
    """

    def __init__(self, key, *, prefix_projection, pre_seq_len, hidden_size,
                 prefix_hidden_size, num_hidden_layers,
                 dtype=jnp.float32, compute_dtype=jnp.bfloat16):
        self.prefix_projection = prefix_projection
        out_dim = num_hidden_layers * 2 * hidden_size
        k0, k1, k2, k3, k4 = jax.random.split(key, 5)
        if prefix_projection:
            self.embedding = jax.random.normal(k0, (pre_seq_len, hidden_size), dtype) * 0.02
            self.w1 = jax.random.normal(k1, (hidden_size, prefix_hidden_size), dtype) * 0.02
            self.b1 = jax.random.normal(k2, (1, prefix_hidden_size), dtype) * 0.02
            self.w2 = jax.random.normal(k3, (prefix_hidden_size, out_dim), dtype) * 0.02
            self.b2 = jax.random.normal(k4, (1, out_dim), dtype) * 0.02
            # One-time casts (kept out of the per-call hot path).
            self.w1_c = self.w1.astype(compute_dtype)
            self.w2_c = self.w2.astype(compute_dtype)
            self.b1_f = self.b1.astype(jnp.float32)
            self.b2_f = self.b2.astype(jnp.float32)
        else:
            self.embedding = jax.random.normal(k0, (pre_seq_len, out_dim), dtype) * 0.02


def prefix_encoder_forward(params: PrefixEncoderParams, prefix: jnp.ndarray,
                           out_dtype=jnp.float32):
    """prefix: (B, P) int32 token ids -> (B, P, 2*layers*hidden)."""
    B, P = prefix.shape
    if params.prefix_projection:
        # TODO(synk): embedding gather kept in plain JAX; could be fused via
        # PrefetchScalarGridSpec + pl.Element row indexing for a modest win.
        x = jnp.take(params.embedding, prefix.reshape(-1), axis=0)      # (B*P, H)
        y = prefix_mlp(x, params.w1_c, params.b1_f, params.w2_c, params.b2_f,
                       out_dtype=out_dtype)                             # (B*P, OUT)
        return y.reshape(B, P, -1)
    # Pure gather — no matmul/reduction hot path, kept in plain JAX.
    return jnp.take(params.embedding, prefix, axis=0)


# ----------------------------------------------------------------------------
# Reference (pure jnp, mirroring the kernel's bf16 operand casts).
# ----------------------------------------------------------------------------
def prefix_encoder_ref(params: PrefixEncoderParams, prefix: jnp.ndarray,
                       compute_dtype=jnp.bfloat16):
    if params.prefix_projection:
        t = jnp.take(params.embedding, prefix, axis=0)
        B, P, H = t.shape
        x = t.reshape(B * P, H).astype(compute_dtype)
        h = jnp.dot(x, params.w1.astype(compute_dtype),
                    preferred_element_type=jnp.float32)
        h = jnp.tanh(h + params.b1.astype(jnp.float32)).astype(compute_dtype)
        y = jnp.dot(h, params.w2.astype(compute_dtype),
                    preferred_element_type=jnp.float32)
        y = y + params.b2.astype(jnp.float32)
        return y.reshape(B, P, -1)
    return jnp.take(params.embedding, prefix, axis=0)


if __name__ == "__main__":
    # Small config consistent with the module:
    #   batch=2, prefix length=8, hidden=32, prefix_hidden_size=64,
    #   num_hidden_layers=2  -> out_dim = 2*2*32 = 128
    B, P = 2, 8
    hidden_size = 32
    prefix_hidden_size = 64
    num_hidden_layers = 2

    key = jax.random.PRNGKey(0)
    kp, kt = jax.random.split(key)
    params = PrefixEncoderParams(
        kp,
        prefix_projection=True,
        pre_seq_len=P,
        hidden_size=hidden_size,
        prefix_hidden_size=prefix_hidden_size,
        num_hidden_layers=num_hidden_layers,
    )

    # prefix token ids: (B, P) in [0, pre_seq_len)
    prefix = jax.random.randint(kt, (B, P), 0, P, dtype=jnp.int32)

    out = prefix_encoder_forward(params, prefix)
    out = jax.block_until_ready(out)

    ref = prefix_encoder_ref(params, prefix)
    assert out.shape == (B, P, num_hidden_layers * 2 * hidden_size), out.shape
    assert jnp.allclose(out, ref, atol=2e-4, rtol=2e-3), "mismatch vs reference"

    print("KERNEL_OK")
</pallas_src>

<mosaic_0001>
module attributes {stable_mosaic.version = 11 : i64} {
  func.func @_layer1_kernel(%arg0: i32, %arg1: i32, %arg2: memref<16x32xbf16, #tpu.memory_space<vmem>>, %arg3: memref<32x64xbf16, #tpu.memory_space<vmem>>, %arg4: memref<1x64xf32, #tpu.memory_space<vmem>>, %arg5: memref<16x64xbf16, #tpu.memory_space<vmem>>, %arg6: memref<16x64xf32, #tpu.memory_space<vmem>>) attributes {dimension_semantics = [#tpu.dimension_semantics<parallel>, #tpu.dimension_semantics<arbitrary>], iteration_bounds = array<i64: 1, 1>, scalar_prefetch = 0 : i64, scratch_operands = 1 : i64, tpu.core_type = #tpu.core_type<tc>, window_params = [{transform_indices = @transform_0, window_bounds = array<i64: 16, 32>}, {transform_indices = @transform_1, window_bounds = array<i64: 32, 64>}, {pipeline_mode = #tpu.pipeline_mode<synchronous>, transform_indices = @transform_2, window_bounds = array<i64: 1, 64>}, {transform_indices = @transform_3, window_bounds = array<i64: 16, 64>}]} {
    %c0_i32 = arith.constant 0 : i32
    %0 = arith.cmpi eq, %arg1, %c0_i32 : i32
    %1 = arith.extui %0 : i1 to i32
    %c0_i32_0 = arith.constant 0 : i32
    %2 = arith.cmpi ne, %1, %c0_i32_0 : i32
    scf.if %2 {
      %cst_10 = arith.constant 0.000000e+00 : f32
      %12 = vector.broadcast %cst_10 : f32 to vector<16x64xf32>
      %c0_11 = arith.constant 0 : index
      %c0_12 = arith.constant 0 : index
      %13 = vector.load %arg6[%c0_11, %c0_12] : memref<16x64xf32, #tpu.memory_space<vmem>>, vector<16x64xf32>
      tpu.vector_store %arg6[%c0_11, %c0_12], %12 {strides = array<i32>} : memref<16x64xf32, #tpu.memory_space<vmem>>, vector<16x64xf32>,
    } else {
    }
    %c0 = arith.constant 0 : index
    %c0_1 = arith.constant 0 : index
    %3 = vector.load %arg6[%c0, %c0_1] : memref<16x64xf32, #tpu.memory_space<vmem>>, vector<16x64xf32>
    %c0_2 = arith.constant 0 : index
    %c0_3 = arith.constant 0 : index
    %4 = vector.load %arg2[%c0_2, %c0_3] : memref<16x32xbf16, #tpu.memory_space<vmem>>, vector<16x32xbf16>
    %c0_4 = arith.constant 0 : index
    %c0_5 = arith.constant 0 : index
    %5 = vector.load %arg3[%c0_4, %c0_5] : memref<32x64xbf16, #tpu.memory_space<vmem>>, vector<32x64xbf16>
    %cst = arith.constant dense<0.000000e+00> : vector<16x64xf32>
    %6 = tpu.matmul %4, %5, %cst {dimension_numbers = #tpu.dot_dimension_numbers<[1], [0], [0], [1], [0, 0, 1, 1], [], []>} : vector<16x32xbf16>, vector<32x64xbf16>, vector<16x64xf32> -> vector<16x64xf32>
    %7 = arith.addf %3, %6 : vector<16x64xf32>
    %c0_6 = arith.constant 0 : index
    %c0_7 = arith.constant 0 : index
    %8 = vector.load %arg6[%c0_6, %c0_7] : memref<16x64xf32, #tpu.memory_space<vmem>>, vector<16x64xf32>
    tpu.vector_store %arg6[%c0_6, %c0_7], %7 {strides = array<i32>} : memref<16x64xf32, #tpu.memory_space<vmem>>, vector<16x64xf32>,
    %c0_i32_8 = arith.constant 0 : i32
    %9 = arith.cmpi eq, %arg1, %c0_i32_8 : i32
    %10 = arith.extui %9 : i1 to i32
    %c0_i32_9 = arith.constant 0 : i32
    %11 = arith.cmpi ne, %10, %c0_i32_9 : i32
    scf.if %11 {
      %c0_10 = arith.constant 0 : index
      %c0_11 = arith.constant 0 : index
      %12 = vector.load %arg6[%c0_10, %c0_11] : memref<16x64xf32, #tpu.memory_space<vmem>>, vector<16x64xf32>
      %c0_12 = arith.constant 0 : index
      %c0_13 = arith.constant 0 : index
      %13 = vector.load %arg4[%c0_12, %c0_13] : memref<1x64xf32, #tpu.memory_space<vmem>>, vector<1x64xf32>
      %14 = vector.broadcast %13 : vector<1x64xf32> to vector<16x64xf32>
      %15 = arith.addf %12, %14 : vector<16x64xf32>
      %16 = math.tanh %15 : vector<16x64xf32>
      %17 = arith.truncf %16 : vector<16x64xf32> to vector<16x64xbf16>
      %c0_14 = arith.constant 0 : index
      %c0_15 = arith.constant 0 : index
      %18 = vector.load %arg5[%c0_14, %c0_15] : memref<16x64xbf16, #tpu.memory_space<vmem>>, vector<16x64xbf16>
      tpu.vector_store %arg5[%c0_14, %c0_15], %17 {strides = array<i32>} : memref<16x64xbf16, #tpu.memory_space<vmem>>, vector<16x64xbf16>,
    } else {
    }
    return
  }
  func.func @transform_0(%arg0: i32, %arg1: i32) -> (i32, i32) {
    %c0_i32 = arith.constant 0 : i32
    return %arg0, %arg1 : i32, i32
  }
  func.func @transform_1(%arg0: i32, %arg1: i32) -> (i32, i32) {
    %c0_i32 = arith.constant 0 : i32
    %c0_i32_0 = arith.constant 0 : i32
    return %arg1, %c0_i32 : i32, i32
  }
  func.func @transform_2(%arg0: i32, %arg1: i32) -> (i32, i32) {
    %c0_i32 = arith.constant 0 : i32
    %c0_i32_0 = arith.constant 0 : i32
    %c0_i32_1 = arith.constant 0 : i32
    return %c0_i32, %c0_i32_0 : i32, i32
  }
  func.func @transform_3(%arg0: i32, %arg1: i32) -> (i32, i32) {
    %c0_i32 = arith.constant 0 : i32
    %c0_i32_0 = arith.constant 0 : i32
    return %arg0, %c0_i32 : i32, i32
  }
}

</mosaic_0001>

<llo_original>
// kernel: tpu_custom_call.1
$region0: #{tpu_custom_call.1}
  #allocation0 [shape = 'u32[]', space=smem, size = 0x4, offset = 0x4, fixed_abs, tag = 'smem constant byte address 0x4 - core index']
  #allocation1 [shape = 'u32[144,128]{1,0:T(1,128)}', space=vmem, size = 0x12000, scoped, tag = 'internal scratch']
  #allocation2 [shape = 'f32[16,64]{1,0:T(8,128)}', space=vmem, size = 0x2000, scoped, tag = 'scratch operand']
  %s0 = inlined_call_operand.hbm [shape: bf16[16,32], index: 0, kind: input, shape index: {}]
  %s1 = inlined_call_operand.hbm [shape: bf16[32,64], index: 1, kind: input, shape index: {}]
  %s2 = inlined_call_operand.vmem [shape: f32[1,64], index: 2, kind: input, shape index: {}]
  %s3 = inlined_call_operand.hbm [shape: bf16[16,64], index: 3, kind: output, shape index: {}]
  %s4 = sld [smem:[#allocation0]]
  $region38: #{tpu_custom_call.1} parent=0
    _
  %s6 = ssub.s32 1, %s4
  %s7 = scalar_select 0, %s6, %s4
  $region1: #{tpu_custom_call.1} parent=0
    #allocation3 [shape = 'u8[4096]{0}', space=vmem, size = 0x1000, scoped, tag = 'input window, operand 0, single buffered']
    #allocation4 [shape = 's32[1]{0}', space=sflag, size = 0x4, scoped, tag = 'scoped memory for tpu_custom_call.1']
    #allocation5 [shape = 's32[1]{0}', space=sflag, size = 0x4, scoped, tag = 'scoped memory for tpu_custom_call.1']
    #allocation6 [shape = 'u8[8192]{0}', space=vmem, size = 0x2000, scoped, tag = 'input window, operand 1, single buffered']
    #allocation7 [shape = 's32[1]{0}', space=sflag, size = 0x4, scoped, tag = 'scoped memory for tpu_custom_call.1']
    #allocation8 [shape = 'u8[4096]{0}', space=vmem, size = 0x1000, scoped, tag = 'output window, operand 0, single buffered']
    %8 = vsyncpa [#allocation4], 0
    %9 = vsyncpa [#allocation7], 0
    %10 = vsyncpa [#allocation5], 0
    // Predicated region
    $region2: #{tpu_custom_call.1} parent=1 // pred_check
      _
    $region3: #{tpu_custom_call.1} parent=1 // pred_check_branch
      %12 = sbr.rel (0) target = $region5
    $region4: #{tpu_custom_call.1} parent=1 // pred_region
      %s14 = ssub.s32 128, 128
      %15 = vsyncadd [#allocation4], %s14
      %s16 = sshll.u32 [#allocation3], 4
      %s17 = int_to_ptr.vmem [resolvable:$true] %s16
      %22 = dma.hbm_to_vmem [thread:$0]  %s0, 128, %s17, [#allocation4], 64, 64, 4
    $region5: #{tpu_custom_call.1} parent=1 // pred_fallthru
      _
    // Predicated region
    $region6: #{tpu_custom_call.1} parent=1 // pred_check
      _
    $region7: #{tpu_custom_call.1} parent=1 // pred_check_branch
      %24 = sbr.rel (0) target = $region9
    $region8: #{tpu_custom_call.1} parent=1 // pred_region
      %s26 = ssub.s32 256, 256
      %27 = vsyncadd [#allocation7], %s26
      %s28 = sshll.u32 [#allocation6], 4
      %s29 = int_to_ptr.vmem [resolvable:$true] %s28
      %34 = dma.hbm_to_vmem [thread:$0]  %s1, 256, %s29, [#allocation7], 64, 64, 4
    $region9: #{tpu_custom_call.1} parent=1 // pred_fallthru
      _
    // Predicated region
    $region10: #{tpu_custom_call.1} parent=1 // pred_check
      _
    $region11: #{tpu_custom_call.1} parent=1 // pred_check_branch
      %36 = sbr.rel (0) target = $region13
    $region12: #{tpu_custom_call.1} parent=1 // pred_region
      _
    $region13: #{tpu_custom_call.1} parent=1 // pred_fallthru
      _
    // Predicated region
    $region14: #{tpu_custom_call.1} parent=1 // pred_check
      _
    $region15: #{tpu_custom_call.1} parent=1 // pred_check_branch
      %38 = sbr.rel (0) target = $region17
    $region16: #{tpu_custom_call.1} parent=1 // pred_region
      %39 = dma.done [#allocation4], 128
    $region17: #{tpu_custom_call.1} parent=1 // pred_fallthru
      _
    // Predicated region
    $region18: #{tpu_custom_call.1} parent=1 // pred_check
      _
    $region19: #{tpu_custom_call.1} parent=1 // pred_check_branch
      %41 = sbr.rel (0) target = $region21
    $region20: #{tpu_custom_call.1} parent=1 // pred_region
      %42 = dma.done [#allocation7], 256
    $region21: #{tpu_custom_call.1} parent=1 // pred_fallthru
      _
    %p44 = scmp.eq.s32.totalorder 0, 0
    // Predicated region
    $region22: #{tpu_custom_call.1} parent=1 // pred_check
      %p45 = pneg %p44
    $region23: #{tpu_custom_call.1} parent=1 // pred_check_branch
      %47 = sbr.rel (%p45) target = $region25
    $region24: #{tpu_custom_call.1} parent=1 // pred_region
      %vm48 = vcmask 523264
      %49 = vst.msk [vmem:[#allocation2] sm:$0xff] %vm48, 0.0
      %50 = vst.msk [vmem:[#allocation2 + $0x8] sm:$0xff] %vm48, 0.0
    $region25: #{tpu_custom_call.1} parent=1 // pred_fallthru
      _
    %v51 = vld [vmem:[#allocation2] sm:$0xff]
    %v52 = vld [vmem:[#allocation2 + $0x8] sm:$0xff]
    %v53 = vld [vmem:[#allocation3] sm:$0xf]
    %v54 = vld [vmem:[#allocation3 + $0x4] sm:$0xf]
    %v55 = vld [vmem:[#allocation6] sm:$0xf]
    %v56 = vld [vmem:[#allocation6 + $0x4] sm:$0xf]
    %v57 = vld [vmem:[#allocation6 + $0x8] sm:$0xf]
    %v58 = vld [vmem:[#allocation6 + $0xc] sm:$0xf]
    %v61 = vunpack.c.l.b16 %v53
    %v62 = vunpack.c.l.b16 %v54
    %v63 = vpack.c.b16 %v62, %v61
    %v68 = vunpack.c.l.b16 %v55
    %v69 = vunpack.c.l.b16 %v56
    %v70 = vunpack.c.l.b16 %v57
    %v71 = vunpack.c.l.b16 %v58
    %v72 = vpack.c.b16 %v69, %v68
    %v73 = vpack.c.b16 %v71, %v70
    %vm76 = vcmask 261120
    %v78 = vsel %vm76, %v63, 0
    %80 = vmatprep.subr.bf16.mxu0 0
    %81 = vmatpush1.bf16.msra.mxu0 0
    %82 = vmatprep.subr.bf16.mxu0 0
    %83 = vmatpush1.bf16.msra.mxu0 0
    %84 = vmatprep.subr.bf16.mxu0 0
    %85 = vmatpush1.bf16.msra.mxu0 0
    %86 = vmatprep.subr.bf16.mxu0 0
    %87 = vmatpush1.bf16.msra.mxu0 0
    %88 = vmatprep.subr.bf16.mxu0 0
    %89 = vmatpush1.bf16.msra.mxu0 0
    %90 = vmatprep.subr.bf16.mxu0 0
    %91 = vmatpush1.bf16.msra.mxu0 0
    %92 = vmatprep.subr.bf16.mxu0 0
    %93 = vmatpush1.bf16.msra.mxu0 %v73
    %94 = vmatprep.subr.bf16.mxu0 0
    %95 = vmatpush1.bf16.msra.mxu0 %v72
    %96 = vmatprep.subr.bf16.mxu0 0
    %97 = vmatpush2.bf16.msra.mxu0 0
    %98 = vmatprep.subr.bf16.mxu0 0
    %99 = vmatpush2.bf16.msra.mxu0 0
    %100 = vmatprep.subr.bf16.mxu0 0
    %101 = vmatpush2.bf16.msra.mxu0 0
    %102 = vmatprep.subr.bf16.mxu0 0
    %103 = vmatpush2.bf16.msra.mxu0 0
    %104 = vmatprep.subr.bf16.mxu0 0
    %105 = vmatpush2.bf16.msra.mxu0 0
    %106 = vmatprep.subr.bf16.mxu0 0
    %107 = vmatpush2.bf16.msra.mxu0 0
    %108 = vmatprep.subr.bf16.mxu0 0
    %109 = vmatpush2.bf16.msra.mxu0 0
    %110 = vmatprep.subr.bf16.mxu0 0
    %111 = vmatpush2.bf16.msra.mxu0 0
    %112 = vmatprep.mubr.bf16.mxu0 0
    %113 = vmatmul.mubr.bf16.gmra.mxu0 %v78
    %v114 = vpop.f32.mrf.mxu0
    %v115 = vadd.f32 0.0, %v114
    %v116 = vpop.f32.mrf.mxu0
    %v117 = vpop.f32.mrf.mxu0
    %v118 = vadd.f32 0.0, %v117
    %v119 = vpop.f32.mrf.mxu0
    %120 = vdwg.mxu0
    %v121 = vadd.f32 %v51, %v115
    %v122 = vadd.f32 %v52, %v118
    %vm123 = vcmask 523264
    %124 = vst.msk [vmem:[#allocation2] sm:$0xff] %vm123, %v121
    %125 = vst.msk [vmem:[#allocation2 + $0x8] sm:$0xff] %vm123, %v122
    // Predicated region
    $region26: #{tpu_custom_call.1} parent=1 // pred_check
      %p126 = pneg %p44
    $region27: #{tpu_custom_call.1} parent=1 // pred_check_branch
      %128 = sbr.rel (%p126) target = $region29
    $region28: #{tpu_custom_call.1} parent=1 // pred_region
      %v129 = vld [vmem:[#allocation2] sm:$0xff]
      %v130 = vld [vmem:[#allocation2 + $0x8] sm:$0xff]
      %v131 = vld [vmem:[%s2] sm:$0x1]
      %v133 = vlaneseq
      %v134 = vshrl.u32 %v133, 7
      %v135 = vsub.s32 0, %v134
      %v136 = vrot.slane %v131, %v135
      %v138 = vadd.f32 %v129, %v136
      %v139 = vadd.f32 %v130, %v136
      %v140 = vtanh.pop %v138
      %v141 = vtanh.pop %v139
      %v142 = vpack.c.bf16 %v141, %v140
      %v144 = vunpack.c.l.b16 %v142
      %v145 = vunpack.c.h.b16 %v142
      %v146 = vpack.c.b16 %v144, %v144
      %v147 = vpack.c.b16 %v145, %v145
      %vm150 = vcmask 519168
      %151 = vst.msk [vmem:[#allocation8] sm:$0xf] %vm150, %v146
      %152 = vst.msk [vmem:[#allocation8 + $0x4] sm:$0xf] %vm150, %v147
    $region29: #{tpu_custom_call.1} parent=1 // pred_fallthru
      _
    // Predicated region
    $region30: #{tpu_custom_call.1} parent=1 // pred_check
      _
    $region31: #{tpu_custom_call.1} parent=1 // pred_check_branch
      %154 = sbr.rel (0) target = $region33
    $region32: #{tpu_custom_call.1} parent=1 // pred_region
      %s156 = ssub.s32 128, 128
      %157 = vsyncadd [#allocation5], %s156
      %s158 = sshll.u32 [#allocation8], 4
      %s159 = int_to_ptr.vmem [resolvable:$true] %s158
      %164 = dma.vmem_to_hbm [thread:$0]  %s159, 128, %s3, [#allocation5], 64, 64, 4
    $region33: #{tpu_custom_call.1} parent=1 // pred_fallthru
      _
    // Predicated region
    $region34: #{tpu_custom_call.1} parent=1 // pred_check
      _
    $region35: #{tpu_custom_call.1} parent=1 // pred_check_branch
      %166 = sbr.rel (0) target = $region37
    $region36: #{tpu_custom_call.1} parent=1 // pred_region
      %167 = dma.done [#allocation5], 128
    $region37: #{tpu_custom_call.1} parent=1 // pred_fallthru
      _
    %168 = vsyncpa [#allocation4], 1
    %169 = vsyncpa [#allocation7], 1
    %170 = vsyncpa [#allocation5], 1

</llo_original>
